<compile_context>
chip_gen: v6e
topology: v6e:2x2x1
jax: 0.10.0
libtpu: 0.0.40
codegen_flags: <defaults>
</compile_context>

<pallas_src>
import jax
import jax.numpy as jnp
import numpy as np
from jax.experimental import pallas as pl
from jax.experimental.pallas import tpu as pltpu

_SC = 256                      # S-chunk for the attention energy pass
_TO = 256                      # logits (fc output) tile width
_TB_MAX = 512                  # hard cap on batch-tile rows
_VMEM_HEADROOM = 8 * 1024 * 1024


def _round_up(x, m):
    return (x + m - 1) // m * m


def _vmem_limit_bytes():
    """Scoped VMEM limit: ~0.75 of physical, capped at 100 MiB (48 MiB fallback)."""
    try:
        cap = pltpu.get_tpu_info().vmem_capacity_bytes
    except Exception:
        cap = 64 * 1024 * 1024          # conservative (v7x physical VMEM)
    return int(min(0.75 * cap, 100 * 1024 * 1024))


def _tb_cap(S, twoH, H, O, tO, weight_bytes, vmem_budget):
    """Largest batch-tile TB (multiple of 8) whose per-step VMEM fits the budget."""
    sc = min(S, _SC)
    per_row = (
        2 * S * twoH * 2                       # enc tile, bf16, double-buffered
        + sc * H * 4 + sc * twoH * 4           # energy / context S-chunk f32 temps
        + 2 * (tO * 4 + H * 4 + S * 4)         # output blocks, double-buffered
        + 2 * (H * 4 + O * 2)                  # hidden / x input blocks
        + (4 * H + 6 * H + twoH + 2 * S + H) * 4   # h_all, gi, gh, context, scores, h_new
    )
    avail = vmem_budget - 2 * weight_bytes - (4 << 20)
    cap = max(8, min(_TB_MAX, avail // max(per_row, 1)))
    return cap - cap % 8 if cap % 8 else cap


def _select_batch_tiling(B, tb_cap):
    """Pick (TB, Bp): tile rows per grid step and the (possibly padded) batch."""
    if B < 16:
        return B, B                            # too small to split across TensorCores
    # At least two batch tiles (keeps both v7x TCs busy), within the VMEM cap.
    upper = min(tb_cap, _round_up((B + 1) // 2, 8))
    upper -= upper % 8
    upper = max(upper, 8)
    for tb in range(upper, 7, -8):             # prefer a divisor of B -> no enc pad pass
        if B % tb == 0:
            return tb, B
    # TODO(synk): last-tile masking (pl.BoundedSlice) would avoid this full enc rewrite.
    return upper, _round_up(B, upper)


def _make_decoder_kernel(H, SC):
    f32, bf16 = jnp.float32, jnp.bfloat16

    def kernel(enc_ref, h_ref, x_ref,
               wa_e_ref, w_hcat_ref, ba_ref, v_ref,
               w_xc_ref, bi_ref, bh_ref,
               wfc_ref, bfc_ref,
               out_ref, hnew_ref, attn_ref,
               hnew_sc, scores_sc):
        TB, S, twoH = enc_ref.shape
        j = pl.program_id(1)                   # fc / logits tile index

        # ---- attention + GRU: run once per batch tile (innermost O axis at j==0).
        @pl.when(j == 0)
        def _attention_and_gru():
            h = h_ref[...]                                              # (TB, H) f32
            h_bf = h.astype(bf16)

            # Fused h-sourced matmul: [attention hidden-proj (H) | GRU gh gates (3H)].
            h_all = jnp.dot(h_bf, w_hcat_ref[...], preferred_element_type=f32)
            h_proj = h_all[:, :H] + ba_ref[...]                         # (TB, H)
            gh = h_all[:, H:] + bh_ref[...]                             # (TB, 3H)

            v_row = v_ref[...].reshape(1, 1, H)

            def scores_chunk(s0, sc):
                enc_c = enc_ref[:, pl.ds(s0, sc), :]                    # (TB, sc, 2H) bf16
                e = jnp.dot(enc_c.reshape(TB * sc, twoH), wa_e_ref[...],
                            preferred_element_type=f32)
                e = jnp.tanh(e.reshape(TB, sc, H) + h_proj[:, None, :])
                return jnp.sum(e * v_row, axis=-1)                      # (TB, sc) f32

            # S-chunked energy pass bounds the (TB, SC, H) f32 intermediate.
            n_full, rem = divmod(S, SC)
            if n_full > 0:
                @pl.loop(0, n_full)
                def _(c):
                    s0 = pl.multiple_of(c * SC, SC)
                    scores_sc[:, pl.ds(s0, SC)] = scores_chunk(s0, SC)
            if rem > 0:
                s0 = n_full * SC
                scores_sc[:, pl.ds(s0, rem)] = scores_chunk(s0, rem)

            # Softmax over S. Exact reciprocal: attention weights are returned to
            # the caller as probabilities (approx=True would leave ~1e-3 drift).
            scores = scores_sc[...]
            m = jnp.max(scores, axis=-1, keepdims=True)
            p = jnp.exp(scores - m)
            w = p * pl.reciprocal(jnp.sum(p, axis=-1, keepdims=True))
            attn_ref[...] = w
            scores_sc[...] = w            # reuse scratch: weights for the context pass

            # context[b] = sum_s w[b, s] * enc[b, s, :]  (f32 accumulate over bf16 enc)
            def ctx_chunk(s0, sc):
                wc = scores_sc[:, pl.ds(s0, sc)]                        # (TB, sc) f32
                ec = enc_ref[:, pl.ds(s0, sc), :]                       # (TB, sc, 2H) bf16
                return jnp.sum(wc[:, :, None] * ec, axis=1)

            if S <= SC:
                context = jnp.sum(w[:, :, None] * enc_ref[...], axis=1)
            else:
                def body(c, acc):
                    s0 = pl.multiple_of(c * SC, SC)
                    return acc + ctx_chunk(s0, SC)
                context = jax.lax.fori_loop(0, n_full, body,
                                            jnp.zeros((TB, twoH), f32))
                if rem > 0:
                    context = context + ctx_chunk(n_full * SC, rem)

            # GRU cell (nn.Dropout is identity in eval mode). Gates packed [r|z|n];
            # the two input matmuls fused via the stacked [x | context] operand.
            # NOTE: the recurrent matmuls use a bf16 hidden; h_new itself stays f32.
            xin = jnp.concatenate([x_ref[...], context.astype(bf16)], axis=-1)
            gi = jnp.dot(xin, w_xc_ref[...], preferred_element_type=f32) + bi_ref[...]
            # TODO(synk): pad H / 3H to multiples of 128 at pack time so these gate
            # slices are lane-aligned and output stores are fully unmasked.
            r = jax.nn.sigmoid(gi[:, :H] + gh[:, :H])
            z = jax.nn.sigmoid(gi[:, H:2 * H] + gh[:, H:2 * H])
            n = jnp.tanh(gi[:, 2 * H:] + r * gh[:, 2 * H:])
            h_new = (1.0 - z) * n + z * h                               # (TB, H) f32
            hnew_ref[...] = h_new
            hnew_sc[...] = h_new.astype(bf16)

        # ---- output projection tile (TB, tO): runs for every O tile, reusing the
        # ---- bf16 h_new held in VMEM scratch across the inner grid axis.
        out_ref[...] = (jnp.dot(hnew_sc[...], wfc_ref[...],
                                preferred_element_type=f32) + bfc_ref[...])

    return kernel


def pack_params(params):
    """One-time packing of PyTorch-layout parameters into kernel operands.

    Call ONCE outside the autoregressive decode loop; the per-token forward
    below takes the packed dict directly (no per-call slicing / transposing).
    """
    f32, bf16 = jnp.float32, jnp.bfloat16
    Wa = jnp.asarray(params["Wa"], f32)            # (H, 3H)  attention.attention.weight
    H = Wa.shape[0]
    W_ih = jnp.asarray(params["W_ih"], f32)        # (3H, O+2H) rows [r;z;n], cols [x | ctx]
    O = W_ih.shape[1] - 2 * H
    W_hh = jnp.asarray(params["W_hh"], f32)        # (3H, H)
    W_fc = jnp.asarray(params["W_fc"], f32).T      # (H, O)
    b_fc = jnp.asarray(params["b_fc"], f32).reshape(1, O)

    # Pad the fc output axis to a multiple of the logits tile so vocab-sized O can
    # be N-tiled without in-kernel masking (padded logits are trimmed in the wrapper).
    Op = O if O <= _TO else _round_up(O, _TO)
    if Op != O:
        W_fc = jnp.pad(W_fc, ((0, 0), (0, Op - O)))
        b_fc = jnp.pad(b_fc, ((0, 0), (0, Op - O)))

    return dict(
        wa_e=Wa[:, :2 * H].T.astype(bf16),                              # (2H, H)
        # fused h-sourced operand: [attention hidden-proj (H) | GRU gh gates (3H)]
        w_hcat=jnp.concatenate([Wa[:, 2 * H:].T, W_hh.T], axis=1).astype(bf16),  # (H, 4H)
        ba=jnp.asarray(params["ba"], f32).reshape(1, H),
        v=jnp.asarray(params["v"], f32).reshape(1, H),                  # attention.v (no bias)
        # fused GRU input operand for the concatenated [x | context] LHS
        W_xc=W_ih.T.astype(bf16),                                       # (O+2H, 3H)
        b_i=jnp.asarray(params["b_ih"], f32).reshape(1, 3 * H),
        b_h=jnp.asarray(params["b_hh"], f32).reshape(1, 3 * H),
        W_fc=W_fc.astype(bf16),                                         # (H, Op)
        b_fc=b_fc,                                                      # (1, Op)
    )


def decoder_with_attention_forward(x, hidden, enc, packed):
    """x: (B, 1, O), hidden: (1, B, H), enc: (B, S, 2H), packed from pack_params()."""
    B, S, twoH = enc.shape
    H = twoH // 2
    O = x.shape[-1]
    # TODO(synk): only num_layers == 1 GRU stacking is implemented in the kernel.
    assert hidden.shape[0] == 1

    f32, bf16 = jnp.float32, jnp.bfloat16
    h2 = hidden[-1].astype(f32)                    # (B, H)  f32 elementwise GRU path
    x2 = x.reshape(B, O).astype(bf16)              # (B, O)  bf16 MXU operand
    # Encoder features stream through the kernel in bf16 (ideally produced bf16 upstream).
    enc_bf = enc if enc.dtype == bf16 else enc.astype(bf16)

    Op = packed["W_fc"].shape[1]
    tO = Op if Op <= _TO else _TO
    nO = Op // tO

    weight_bytes = sum(int(np.prod(v.shape)) * v.dtype.itemsize for v in packed.values())
    vmem_limit = _vmem_limit_bytes()
    tb_cap = _tb_cap(S, twoH, H, O, tO, weight_bytes, vmem_limit - _VMEM_HEADROOM)
    TB, Bp = _select_batch_tiling(B, tb_cap)
    if Bp != B:
        pad = Bp - B
        enc_bf = jnp.pad(enc_bf, ((0, pad), (0, 0), (0, 0)))
        h2 = jnp.pad(h2, ((0, pad), (0, 0)))
        x2 = jnp.pad(x2, ((0, pad), (0, 0)))
    nt = Bp // TB

    kernel = _make_decoder_kernel(H, _SC)

    def wspec(a):
        nd = a.ndim
        # TODO(synk): pipeline_mode=pl.Buffered(1) on these constant-index weight
        # specs would halve weight VMEM residency once validated on this JAX version.
        return pl.BlockSpec(a.shape, lambda i, j: (0,) * nd)

    flops = int(2 * Bp * S * twoH * H + 2 * Bp * H * 4 * H
                + 2 * Bp * (O + twoH) * 3 * H + 2 * Bp * H * Op
                + 4 * Bp * S * twoH + 2 * Bp * S * H)
    transcendentals = int(Bp * S * H + Bp * S + 6 * Bp * H)
    bytes_accessed = int(Bp * S * twoH * 2 + Bp * (H * 4 + O * 2)
                         + weight_bytes + Bp * (Op + H + S) * 4)

    out2, hnew2, attn2 = pl.pallas_call(
        kernel,
        grid=(nt, nO),
        in_specs=[
            pl.BlockSpec((TB, S, twoH), lambda i, j: (i, 0, 0)),   # enc batch tile (bf16)
            pl.BlockSpec((TB, H), lambda i, j: (i, 0)),            # hidden[-1] tile
            pl.BlockSpec((TB, O), lambda i, j: (i, 0)),            # x tile
            wspec(packed["wa_e"]), wspec(packed["w_hcat"]),
            wspec(packed["ba"]), wspec(packed["v"]),
            wspec(packed["W_xc"]), wspec(packed["b_i"]), wspec(packed["b_h"]),
            pl.BlockSpec((H, tO), lambda i, j: (0, j)),            # fc weight N-tile
            pl.BlockSpec((1, tO), lambda i, j: (0, j)),            # fc bias N-tile
        ],
        out_specs=(
            pl.BlockSpec((TB, tO), lambda i, j: (i, j)),           # logits tile
            pl.BlockSpec((TB, H), lambda i, j: (i, 0)),            # new hidden
            pl.BlockSpec((TB, S), lambda i, j: (i, 0)),            # attention weights
        ),
        out_shape=(
            jax.ShapeDtypeStruct((Bp, Op), f32),
            jax.ShapeDtypeStruct((Bp, H), f32),
            jax.ShapeDtypeStruct((Bp, S), f32),
        ),
        scratch_shapes=[
            pltpu.VMEM((TB, H), bf16),     # h_new (bf16) reused across fc output tiles
            pltpu.VMEM((TB, S), f32),      # attention scores / weights staging
        ],
        compiler_params=pltpu.CompilerParams(
            dimension_semantics=("parallel", "arbitrary"),
            vmem_limit_bytes=vmem_limit,
        ),
        cost_estimate=pl.CostEstimate(flops=flops,
                                      transcendentals=transcendentals,
                                      bytes_accessed=bytes_accessed),
    )(enc_bf, h2, x2,
      packed["wa_e"], packed["w_hcat"], packed["ba"], packed["v"],
      packed["W_xc"], packed["b_i"], packed["b_h"],
      packed["W_fc"], packed["b_fc"])

    # Restore the module's output shapes in plain JAX (layout plumbing only).
    output = out2[:B, :O]                            # (B, O)
    new_hidden = hnew2[:B].reshape(1, B, H)          # (1, B, H)
    attention_weights = attn2[:B].reshape(B, S, 1)   # (B, S, 1)
    return output, new_hidden, attention_weights


def init_params(key, O, H):
    """Deterministic synthetic parameters with PyTorch-layout shapes."""
    ks = jax.random.split(key, 9)

    def u(k, shape, fan_in):
        bound = 1.0 / np.sqrt(fan_in)
        return jax.random.uniform(k, shape, jnp.float32, -bound, bound)

    return dict(
        Wa=u(ks[0], (H, 3 * H), 3 * H),        # attention.attention.weight
        ba=u(ks[1], (H,), 3 * H),              # attention.attention.bias
        v=u(ks[2], (1, H), H),                 # attention.v.weight (no bias)
        W_ih=u(ks[3], (3 * H, 2 * H + O), H),  # gru.weight_ih_l0
        W_hh=u(ks[4], (3 * H, H), H),          # gru.weight_hh_l0
        b_ih=u(ks[5], (3 * H,), H),            # gru.bias_ih_l0
        b_hh=u(ks[6], (3 * H,), H),            # gru.bias_hh_l0
        W_fc=u(ks[7], (O, H), H),              # fc.weight
        b_fc=u(ks[8], (O,), H),                # fc.bias
    )


def reference_forward(x, hidden, enc, params):
    """Pure-JAX f32 reference mirroring the PyTorch forward (eval mode)."""
    h_last = hidden[-1]                                  # (B, H)
    B, S, _ = enc.shape
    H = h_last.shape[-1]
    hid_rep = jnp.broadcast_to(h_last[:, None, :], (B, S, H))
    combined = jnp.concatenate([enc, hid_rep], axis=2)
    energy = jnp.tanh(combined @ params["Wa"].T + params["ba"])
    scores = energy @ params["v"].T                      # (B, S, 1)
    attn = jax.nn.softmax(scores, axis=1)
    context = jnp.sum(attn * enc, axis=1)                # (B, 2H)
    xin = jnp.concatenate([x, context[:, None, :]], axis=2)[:, 0, :]
    gi = xin @ params["W_ih"].T + params["b_ih"]
    gh = h_last @ params["W_hh"].T + params["b_hh"]
    r = jax.nn.sigmoid(gi[:, :H] + gh[:, :H])
    z = jax.nn.sigmoid(gi[:, H:2 * H] + gh[:, H:2 * H])
    n = jnp.tanh(gi[:, 2 * H:] + r * gh[:, 2 * H:])
    h_new = (1.0 - z) * n + z * h_last
    out = h_new @ params["W_fc"].T + params["b_fc"]
    return out, h_new[None], attn


if __name__ == "__main__":
    B, S, H, O = 2, 8, 32, 16          # batch, encoder seq len, hidden, output size
    key = jax.random.PRNGKey(0)
    kx, kh, ke, kp = jax.random.split(key, 4)
    x = jax.random.normal(kx, (B, 1, O), jnp.float32)
    hidden = jax.random.normal(kh, (1, B, H), jnp.float32)
    enc = jax.random.normal(ke, (B, S, 2 * H), jnp.float32)
    params = init_params(kp, O, H)
    packed = pack_params(params)       # one-time packing (hoisted out of the decode loop)

    out, new_hidden, attn = decoder_with_attention_forward(x, hidden, enc, packed)
    out, new_hidden, attn = jax.block_until_ready((out, new_hidden, attn))

    ref_out, ref_hidden, ref_attn = reference_forward(x, hidden, enc, params)
    # bf16 encoder / MXU operands (f32 accumulation) => looser tolerance than the
    # pure-f32 reference.
    assert np.allclose(np.asarray(out), np.asarray(ref_out), atol=3e-2, rtol=3e-2)
    assert np.allclose(np.asarray(new_hidden), np.asarray(ref_hidden), atol=3e-2, rtol=3e-2)
    assert np.allclose(np.asarray(attn), np.asarray(ref_attn), atol=3e-2, rtol=3e-2)
    print("KERNEL_OK")
</pallas_src>

<mosaic_0001>
module attributes {stable_mosaic.version = 11 : i64} {
  func.func @kernel(%arg0: i32, %arg1: i32, %arg2: memref<2x8x64xbf16, #tpu.memory_space<vmem>>, %arg3: memref<2x32xf32, #tpu.memory_space<vmem>>, %arg4: memref<2x16xbf16, #tpu.memory_space<vmem>>, %arg5: memref<64x32xbf16, #tpu.memory_space<vmem>>, %arg6: memref<32x128xbf16, #tpu.memory_space<vmem>>, %arg7: memref<1x32xf32, #tpu.memory_space<vmem>>, %arg8: memref<1x32xf32, #tpu.memory_space<vmem>>, %arg9: memref<80x96xbf16, #tpu.memory_space<vmem>>, %arg10: memref<1x96xf32, #tpu.memory_space<vmem>>, %arg11: memref<1x96xf32, #tpu.memory_space<vmem>>, %arg12: memref<32x16xbf16, #tpu.memory_space<vmem>>, %arg13: memref<1x16xf32, #tpu.memory_space<vmem>>, %arg14: memref<2x16xf32, #tpu.memory_space<vmem>>, %arg15: memref<2x32xf32, #tpu.memory_space<vmem>>, %arg16: memref<2x8xf32, #tpu.memory_space<vmem>>, %arg17: memref<2x32xbf16, #tpu.memory_space<vmem>>, %arg18: memref<2x8xf32, #tpu.memory_space<vmem>>) attributes {dimension_semantics = [#tpu.dimension_semantics<parallel>, #tpu.dimension_semantics<arbitrary>], iteration_bounds = array<i64: 1, 1>, scalar_prefetch = 0 : i64, scratch_operands = 2 : i64, tpu.core_type = #tpu.core_type<tc>, window_params = [{transform_indices = @transform_0, window_bounds = array<i64: 2, 8, 64>}, {transform_indices = @transform_1, window_bounds = array<i64: 2, 32>}, {transform_indices = @transform_2, window_bounds = array<i64: 2, 16>}, {pipeline_mode = #tpu.pipeline_mode<synchronous>, transform_indices = @transform_3, window_bounds = array<i64: 64, 32>}, {pipeline_mode = #tpu.pipeline_mode<synchronous>, transform_indices = @transform_4, window_bounds = array<i64: 32, 128>}, {pipeline_mode = #tpu.pipeline_mode<synchronous>, transform_indices = @transform_5, window_bounds = array<i64: 1, 32>}, {pipeline_mode = #tpu.pipeline_mode<synchronous>, transform_indices = @transform_6, window_bounds = array<i64: 1, 32>}, {pipeline_mode = #tpu.pipeline_mode<synchronous>, transform_indices = @transform_7, window_bounds = array<i64: 80, 96>}, {pipeline_mode = #tpu.pipeline_mode<synchronous>, transform_indices = @transform_8, window_bounds = array<i64: 1, 96>}, {pipeline_mode = #tpu.pipeline_mode<synchronous>, transform_indices = @transform_9, window_bounds = array<i64: 1, 96>}, {transform_indices = @transform_10, window_bounds = array<i64: 32, 16>}, {transform_indices = @transform_11, window_bounds = array<i64: 1, 16>}, {transform_indices = @transform_12, window_bounds = array<i64: 2, 16>}, {transform_indices = @transform_13, window_bounds = array<i64: 2, 32>}, {transform_indices = @transform_14, window_bounds = array<i64: 2, 8>}]} {
    %c0_i32 = arith.constant 0 : i32
    %0 = arith.cmpi eq, %arg1, %c0_i32 : i32
    %1 = arith.extui %0 : i1 to i32
    %c0_i32_0 = arith.constant 0 : i32
    %2 = arith.cmpi ne, %1, %c0_i32_0 : i32
    scf.if %2 {
      %c0_8 = arith.constant 0 : index
      %c0_9 = arith.constant 0 : index
      %10 = vector.load %arg3[%c0_8, %c0_9] : memref<2x32xf32, #tpu.memory_space<vmem>>, vector<2x32xf32>
      %11 = arith.truncf %10 : vector<2x32xf32> to vector<2x32xbf16>
      %c0_10 = arith.constant 0 : index
      %c0_11 = arith.constant 0 : index
      %12 = vector.load %arg6[%c0_10, %c0_11] : memref<32x128xbf16, #tpu.memory_space<vmem>>, vector<32x128xbf16>
      %cst_12 = arith.constant dense<0.000000e+00> : vector<2x128xf32>
      %13 = tpu.matmul %11, %12, %cst_12 {dimension_numbers = #tpu.dot_dimension_numbers<[1], [0], [0], [1], [0, 0, 1, 1], [], []>} : vector<2x32xbf16>, vector<32x128xbf16>, vector<2x128xf32> -> vector<2x128xf32>
      %14 = vector.extract_strided_slice %13 {offsets = [0, 0], sizes = [2, 32], strides = [1, 1]} : vector<2x128xf32> to vector<2x32xf32>
      %c0_13 = arith.constant 0 : index
      %c0_14 = arith.constant 0 : index
      %15 = vector.load %arg7[%c0_13, %c0_14] : memref<1x32xf32, #tpu.memory_space<vmem>>, vector<1x32xf32>
      %16 = vector.broadcast %15 : vector<1x32xf32> to vector<2x32xf32>
      %17 = arith.addf %14, %16 : vector<2x32xf32>
      %18 = vector.extract_strided_slice %13 {offsets = [0, 32], sizes = [2, 96], strides = [1, 1]} : vector<2x128xf32> to vector<2x96xf32>
      %c0_15 = arith.constant 0 : index
      %c0_16 = arith.constant 0 : index
      %19 = vector.load %arg11[%c0_15, %c0_16] : memref<1x96xf32, #tpu.memory_space<vmem>>, vector<1x96xf32>
      %20 = vector.broadcast %19 : vector<1x96xf32> to vector<2x96xf32>
      %21 = arith.addf %18, %20 : vector<2x96xf32>
      %c0_17 = arith.constant 0 : index
      %c0_18 = arith.constant 0 : index
      %22 = vector.load %arg8[%c0_17, %c0_18] : memref<1x32xf32, #tpu.memory_space<vmem>>, vector<1x32xf32>
      %23 = vector.shape_cast %22 : vector<1x32xf32> to vector<1x1x32xf32>
      %c0_19 = arith.constant 0 : index
      %c0_20 = arith.constant 0 : index
      %c0_21 = arith.constant 0 : index
      %24 = vector.load %arg2[%c0_19, %c0_20, %c0_21] : memref<2x8x64xbf16, #tpu.memory_space<vmem>>, vector<2x8x64xbf16>
      %25 = vector.shape_cast %24 : vector<2x8x64xbf16> to vector<16x64xbf16>
      %c0_22 = arith.constant 0 : index
      %c0_23 = arith.constant 0 : index
      %26 = vector.load %arg5[%c0_22, %c0_23] : memref<64x32xbf16, #tpu.memory_space<vmem>>, vector<64x32xbf16>
      %cst_24 = arith.constant dense<0.000000e+00> : vector<16x32xf32>
      %27 = tpu.matmul %25, %26, %cst_24 {dimension_numbers = #tpu.dot_dimension_numbers<[1], [0], [0], [1], [0, 0, 1, 1], [], []>} : vector<16x64xbf16>, vector<64x32xbf16>, vector<16x32xf32> -> vector<16x32xf32>
      %28 = vector.shape_cast %27 : vector<16x32xf32> to vector<2x8x32xf32>
      %29 = vector.shape_cast %17 : vector<2x32xf32> to vector<2x1x32xf32>
      %30 = vector.broadcast %29 : vector<2x1x32xf32> to vector<2x8x32xf32>
      %31 = arith.addf %28, %30 : vector<2x8x32xf32>
      %32 = math.tanh %31 : vector<2x8x32xf32>
      %33 = vector.broadcast %23 : vector<1x1x32xf32> to vector<2x8x32xf32>
      %34 = arith.mulf %32, %33 : vector<2x8x32xf32>
      %cst_25 = arith.constant dense<0.000000e+00> : vector<2x8xf32>
      %35 = vector.multi_reduction <add>, %34, %cst_25 [2] : vector<2x8x32xf32> to vector<2x8xf32>
      %c0_26 = arith.constant 0 : index
      %c0_27 = arith.constant 0 : index
      %36 = vector.load %arg18[%c0_26, %c0_27] : memref<2x8xf32, #tpu.memory_space<vmem>>, vector<2x8xf32>
      tpu.vector_store %arg18[%c0_26, %c0_27], %35 {strides = array<i32>} : memref<2x8xf32, #tpu.memory_space<vmem>>, vector<2x8xf32>,
      %c0_28 = arith.constant 0 : index
      %c0_29 = arith.constant 0 : index
      %37 = vector.load %arg18[%c0_28, %c0_29] : memref<2x8xf32, #tpu.memory_space<vmem>>, vector<2x8xf32>
      %cst_30 = arith.constant dense<0xFF800000> : vector<2xf32>
      %38 = vector.multi_reduction <maximumf>, %37, %cst_30 [1] : vector<2x8xf32> to vector<2xf32>
      %39 = vector.shape_cast %38 : vector<2xf32> to vector<2x1xf32>
      %40 = vector.broadcast %39 : vector<2x1xf32> to vector<2x8xf32>
      %41 = arith.subf %37, %40 : vector<2x8xf32>
      %42 = math.exp %41 : vector<2x8xf32>
      %cst_31 = arith.constant dense<0.000000e+00> : vector<2xf32>
      %43 = vector.multi_reduction <add>, %42, %cst_31 [1] : vector<2x8xf32> to vector<2xf32>
      %44 = vector.shape_cast %43 : vector<2xf32> to vector<2x1xf32>
      %45 = tpu.reciprocal %44 : vector<2x1xf32> -> vector<2x1xf32>
      %46 = vector.broadcast %45 : vector<2x1xf32> to vector<2x8xf32>
      %47 = arith.mulf %42, %46 : vector<2x8xf32>
      %c0_32 = arith.constant 0 : index
      %c0_33 = arith.constant 0 : index
      %48 = vector.load %arg16[%c0_32, %c0_33] : memref<2x8xf32, #tpu.memory_space<vmem>>, vector<2x8xf32>
      tpu.vector_store %arg16[%c0_32, %c0_33], %47 {strides = array<i32>} : memref<2x8xf32, #tpu.memory_space<vmem>>, vector<2x8xf32>,
      %c0_34 = arith.constant 0 : index
      %c0_35 = arith.constant 0 : index
      %49 = vector.load %arg18[%c0_34, %c0_35] : memref<2x8xf32, #tpu.memory_space<vmem>>, vector<2x8xf32>
      tpu.vector_store %arg18[%c0_34, %c0_35], %47 {strides = array<i32>} : memref<2x8xf32, #tpu.memory_space<vmem>>, vector<2x8xf32>,
      %50 = vector.shape_cast %47 : vector<2x8xf32> to vector<2x8x1xf32>
      %c0_36 = arith.constant 0 : index
      %c0_37 = arith.constant 0 : index
      %c0_38 = arith.constant 0 : index
      %51 = vector.load %arg2[%c0_36, %c0_37, %c0_38] : memref<2x8x64xbf16, #tpu.memory_space<vmem>>, vector<2x8x64xbf16>
      %52 = arith.extf %51 : vector<2x8x64xbf16> to vector<2x8x64xf32>
      %53 = vector.broadcast %50 : vector<2x8x1xf32> to vector<2x8x64xf32>
      %54 = arith.mulf %53, %52 : vector<2x8x64xf32>
      %cst_39 = arith.constant dense<0.000000e+00> : vector<2x64xf32>
      %55 = vector.multi_reduction <add>, %54, %cst_39 [1] : vector<2x8x64xf32> to vector<2x64xf32>
      %c0_40 = arith.constant 0 : index
      %c0_41 = arith.constant 0 : index
      %56 = vector.load %arg4[%c0_40, %c0_41] : memref<2x16xbf16, #tpu.memory_space<vmem>>, vector<2x16xbf16>
      %57 = arith.truncf %55 : vector<2x64xf32> to vector<2x64xbf16>
      %58 = tpu.concatenate %56, %57 in 1 : vector<2x16xbf16>, vector<2x64xbf16> -> vector<2x80xbf16>
      %c0_42 = arith.constant 0 : index
      %c0_43 = arith.constant 0 : index
      %59 = vector.load %arg9[%c0_42, %c0_43] : memref<80x96xbf16, #tpu.memory_space<vmem>>, vector<80x96xbf16>
      %cst_44 = arith.constant dense<0.000000e+00> : vector<2x96xf32>
      %60 = tpu.matmul %58, %59, %cst_44 {dimension_numbers = #tpu.dot_dimension_numbers<[1], [0], [0], [1], [0, 0, 1, 1], [], []>} : vector<2x80xbf16>, vector<80x96xbf16>, vector<2x96xf32> -> vector<2x96xf32>
      %c0_45 = arith.constant 0 : index
      %c0_46 = arith.constant 0 : index
      %61 = vector.load %arg10[%c0_45, %c0_46] : memref<1x96xf32, #tpu.memory_space<vmem>>, vector<1x96xf32>
      %62 = vector.broadcast %61 : vector<1x96xf32> to vector<2x96xf32>
      %63 = arith.addf %60, %62 : vector<2x96xf32>
      %64 = vector.extract_strided_slice %63 {offsets = [0, 0], sizes = [2, 32], strides = [1, 1]} : vector<2x96xf32> to vector<2x32xf32>
      %65 = vector.extract_strided_slice %21 {offsets = [0, 0], sizes = [2, 32], strides = [1, 1]} : vector<2x96xf32> to vector<2x32xf32>
      %66 = arith.addf %64, %65 : vector<2x32xf32>
      %67 = arith.negf %66 : vector<2x32xf32>
      %68 = math.exp %67 : vector<2x32xf32>
      %cst_47 = arith.constant 1.000000e+00 : f32
      %69 = vector.broadcast %cst_47 : f32 to vector<2x32xf32>
      %70 = arith.addf %69, %68 : vector<2x32xf32>
      %71 = arith.divf %69, %70 : vector<2x32xf32>
      %72 = vector.extract_strided_slice %63 {offsets = [0, 32], sizes = [2, 32], strides = [1, 1]} : vector<2x96xf32> to vector<2x32xf32>
      %73 = vector.extract_strided_slice %21 {offsets = [0, 32], sizes = [2, 32], strides = [1, 1]} : vector<2x96xf32> to vector<2x32xf32>
      %74 = arith.addf %72, %73 : vector<2x32xf32>
      %75 = arith.negf %74 : vector<2x32xf32>
      %76 = math.exp %75 : vector<2x32xf32>
      %cst_48 = arith.constant 1.000000e+00 : f32
      %77 = vector.broadcast %cst_48 : f32 to vector<2x32xf32>
      %78 = arith.addf %77, %76 : vector<2x32xf32>
      %79 = arith.divf %77, %78 : vector<2x32xf32>
      %80 = vector.extract_strided_slice %63 {offsets = [0, 64], sizes = [2, 32], strides = [1, 1]} : vector<2x96xf32> to vector<2x32xf32>
      %81 = vector.extract_strided_slice %21 {offsets = [0, 64], sizes = [2, 32], strides = [1, 1]} : vector<2x96xf32> to vector<2x32xf32>
      %82 = arith.mulf %71, %81 : vector<2x32xf32>
      %83 = arith.addf %80, %82 : vector<2x32xf32>
      %84 = math.tanh %83 : vector<2x32xf32>
      %cst_49 = arith.constant 1.000000e+00 : f32
      %85 = vector.broadcast %cst_49 : f32 to vector<2x32xf32>
      %86 = arith.subf %85, %79 : vector<2x32xf32>
      %87 = arith.mulf %86, %84 : vector<2x32xf32>
      %88 = arith.mulf %79, %10 : vector<2x32xf32>
      %89 = arith.addf %87, %88 : vector<2x32xf32>
      %c0_50 = arith.constant 0 : index
      %c0_51 = arith.constant 0 : index
      %90 = vector.load %arg15[%c0_50, %c0_51] : memref<2x32xf32, #tpu.memory_space<vmem>>, vector<2x32xf32>
      tpu.vector_store %arg15[%c0_50, %c0_51], %89 {strides = array<i32>} : memref<2x32xf32, #tpu.memory_space<vmem>>, vector<2x32xf32>,
      %91 = arith.truncf %89 : vector<2x32xf32> to vector<2x32xbf16>
      %c0_52 = arith.constant 0 : index
      %c0_53 = arith.constant 0 : index
      %92 = vector.load %arg17[%c0_52, %c0_53] : memref<2x32xbf16, #tpu.memory_space<vmem>>, vector<2x32xbf16>
      tpu.vector_store %arg17[%c0_52, %c0_53], %91 {strides = array<i32>} : memref<2x32xbf16, #tpu.memory_space<vmem>>, vector<2x32xbf16>,
    } else {
    }
    %c0 = arith.constant 0 : index
    %c0_1 = arith.constant 0 : index
    %3 = vector.load %arg17[%c0, %c0_1] : memref<2x32xbf16, #tpu.memory_space<vmem>>, vector<2x32xbf16>
    %c0_2 = arith.constant 0 : index
    %c0_3 = arith.constant 0 : index
    %4 = vector.load %arg12[%c0_2, %c0_3] : memref<32x16xbf16, #tpu.memory_space<vmem>>, vector<32x16xbf16>
    %cst = arith.constant dense<0.000000e+00> : vector<2x16xf32>
    %5 = tpu.matmul %3, %4, %cst {dimension_numbers = #tpu.dot_dimension_numbers<[1], [0], [0], [1], [0, 0, 1, 1], [], []>} : vector<2x32xbf16>, vector<32x16xbf16>, vector<2x16xf32> -> vector<2x16xf32>
    %c0_4 = arith.constant 0 : index
    %c0_5 = arith.constant 0 : index
    %6 = vector.load %arg13[%c0_4, %c0_5] : memref<1x16xf32, #tpu.memory_space<vmem>>, vector<1x16xf32>
    %7 = vector.broadcast %6 : vector<1x16xf32> to vector<2x16xf32>
    %8 = arith.addf %5, %7 : vector<2x16xf32>
    %c0_6 = arith.constant 0 : index
    %c0_7 = arith.constant 0 : index
    %9 = vector.load %arg14[%c0_6, %c0_7] : memref<2x16xf32, #tpu.memory_space<vmem>>, vector<2x16xf32>
    tpu.vector_store %arg14[%c0_6, %c0_7], %8 {strides = array<i32>} : memref<2x16xf32, #tpu.memory_space<vmem>>, vector<2x16xf32>,
    return
  }
  func.func @transform_0(%arg0: i32, %arg1: i32) -> (i32, i32, i32) {
    %c0_i32 = arith.constant 0 : i32
    %c0_i32_0 = arith.constant 0 : i32
    %c0_i32_1 = arith.constant 0 : i32
    return %arg0, %c0_i32, %c0_i32_0 : i32, i32, i32
  }
  func.func @transform_1(%arg0: i32, %arg1: i32) -> (i32, i32) {
    %c0_i32 = arith.constant 0 : i32
    %c0_i32_0 = arith.constant 0 : i32
    return %arg0, %c0_i32 : i32, i32
  }
  func.func @transform_2(%arg0: i32, %arg1: i32) -> (i32, i32) {
    %c0_i32 = arith.constant 0 : i32
    %c0_i32_0 = arith.constant 0 : i32
    return %arg0, %c0_i32 : i32, i32
  }
  func.func @transform_3(%arg0: i32, %arg1: i32) -> (i32, i32) {
    %c0_i32 = arith.constant 0 : i32
    %c0_i32_0 = arith.constant 0 : i32
    %c0_i32_1 = arith.constant 0 : i32
    return %c0_i32, %c0_i32_0 : i32, i32
  }
  func.func @transform_4(%arg0: i32, %arg1: i32) -> (i32, i32) {
    %c0_i32 = arith.constant 0 : i32
    %c0_i32_0 = arith.constant 0 : i32
    %c0_i32_1 = arith.constant 0 : i32
    return %c0_i32, %c0_i32_0 : i32, i32
  }
  func.func @transform_5(%arg0: i32, %arg1: i32) -> (i32, i32) {
    %c0_i32 = arith.constant 0 : i32
    %c0_i32_0 = arith.constant 0 : i32
    %c0_i32_1 = arith.constant 0 : i32
    return %c0_i32, %c0_i32_0 : i32, i32
  }
  func.func @transform_6(%arg0: i32, %arg1: i32) -> (i32, i32) {
    %c0_i32 = arith.constant 0 : i32
    %c0_i32_0 = arith.constant 0 : i32
    %c0_i32_1 = arith.constant 0 : i32
    return %c0_i32, %c0_i32_0 : i32, i32
  }
  func.func @transform_7(%arg0: i32, %arg1: i32) -> (i32, i32) {
    %c0_i32 = arith.constant 0 : i32
    %c0_i32_0 = arith.constant 0 : i32
    %c0_i32_1 = arith.constant 0 : i32
    return %c0_i32, %c0_i32_0 : i32, i32
  }
  func.func @transform_8(%arg0: i32, %arg1: i32) -> (i32, i32) {
    %c0_i32 = arith.constant 0 : i32
    %c0_i32_0 = arith.constant 0 : i32
    %c0_i32_1 = arith.constant 0 : i32
    return %c0_i32, %c0_i32_0 : i32, i32
  }
  func.func @transform_9(%arg0: i32, %arg1: i32) -> (i32, i32) {
    %c0_i32 = arith.constant 0 : i32
    %c0_i32_0 = arith.constant 0 : i32
    %c0_i32_1 = arith.constant 0 : i32
    return %c0_i32, %c0_i32_0 : i32, i32
  }
  func.func @transform_10(%arg0: i32, %arg1: i32) -> (i32, i32) {
    %c0_i32 = arith.constant 0 : i32
    %c0_i32_0 = arith.constant 0 : i32
    return %c0_i32, %arg1 : i32, i32
  }
  func.func @transform_11(%arg0: i32, %arg1: i32) -> (i32, i32) {
    %c0_i32 = arith.constant 0 : i32
    %c0_i32_0 = arith.constant 0 : i32
    return %c0_i32, %arg1 : i32, i32
  }
  func.func @transform_12(%arg0: i32, %arg1: i32) -> (i32, i32) {
    %c0_i32 = arith.constant 0 : i32
    return %arg0, %arg1 : i32, i32
  }
  func.func @transform_13(%arg0: i32, %arg1: i32) -> (i32, i32) {
    %c0_i32 = arith.constant 0 : i32
    %c0_i32_0 = arith.constant 0 : i32
    return %arg0, %c0_i32 : i32, i32
  }
  func.func @transform_14(%arg0: i32, %arg1: i32) -> (i32, i32) {
    %c0_i32 = arith.constant 0 : i32
    %c0_i32_0 = arith.constant 0 : i32
    return %arg0, %c0_i32 : i32, i32
  }
}

</mosaic_0001>

<llo_original>
// kernel: tpu_custom_call.1
$region0: #{tpu_custom_call.1}
  #allocation0 [shape = 'u32[]', space=smem, size = 0x4, offset = 0x4, fixed_abs, tag = 'smem constant byte address 0x4 - core index']
  #allocation1 [shape = 'u32[144,128]{1,0:T(1,128)}', space=vmem, size = 0x12000, scoped, tag = 'internal scratch']
  #allocation2 [shape = 'bf16[2,32]{1,0:T(2,128)(2,1)}', space=vmem, size = 0x200, scoped, tag = 'scratch operand']
  #allocation3 [shape = 'f32[2,8]{1,0:T(2,128)}', space=vmem, size = 0x400, scoped, tag = 'scratch operand']
  %s0 = inlined_call_operand.vmem [shape: bf16[2,8,64], index: 0, kind: input, shape index: {}]
  %s1 = inlined_call_operand.vmem [shape: f32[2,32], index: 1, kind: input, shape index: {}]
  %s2 = inlined_call_operand.vmem [shape: bf16[2,16], index: 2, kind: input, shape index: {}]
  %s3 = inlined_call_operand.vmem [shape: bf16[64,32], index: 3, kind: input, shape index: {}]
  %s4 = inlined_call_operand.vmem [shape: bf16[32,128], index: 4, kind: input, shape index: {}]
  %s5 = inlined_call_operand.vmem [shape: f32[1,32], index: 5, kind: input, shape index: {}]
  %s6 = inlined_call_operand.vmem [shape: f32[1,32], index: 6, kind: input, shape index: {}]
  %s7 = inlined_call_operand.vmem [shape: bf16[80,96], index: 7, kind: input, shape index: {}]
  %s8 = inlined_call_operand.vmem [shape: f32[1,96], index: 8, kind: input, shape index: {}]
  %s9 = inlined_call_operand.vmem [shape: f32[1,96], index: 9, kind: input, shape index: {}]
  %s10 = inlined_call_operand.vmem [shape: bf16[32,16], index: 10, kind: input, shape index: {}]
  %s11 = inlined_call_operand.vmem [shape: f32[1,16], index: 11, kind: input, shape index: {}]
  %s12 = inlined_call_operand.hbm [shape: f32[2,16], index: 12, kind: output, shape index: {0}]
  %s13 = inlined_call_operand.hbm [shape: f32[2,32], index: 13, kind: output, shape index: {1}]
  %s14 = inlined_call_operand.hbm [shape: f32[2,8], index: 14, kind: output, shape index: {2}]
  %15 = xla_tuple %s12, %s13, %s14
  %s16 = sld [smem:[#allocation0]]
  $region78: #{tpu_custom_call.1} parent=0
    _
  %s18 = ssub.s32 1, %s16
  %s19 = scalar_select 0, %s18, %s16
  $region1: #{tpu_custom_call.1} parent=0
    #allocation4 [shape = 'u8[1024]{0}', space=vmem, size = 0x400, scoped, tag = 'output window, operand 0, single buffered']
    #allocation5 [shape = 's32[1]{0}', space=sflag, size = 0x4, scoped, tag = 'scoped memory for tpu_custom_call.1']
    #allocation6 [shape = 'u8[1024]{0}', space=vmem, size = 0x400, scoped, tag = 'output window, operand 1, single buffered']
    #allocation7 [shape = 's32[1]{0}', space=sflag, size = 0x4, scoped, tag = 'scoped memory for tpu_custom_call.1']
    #allocation8 [shape = 'u8[1024]{0}', space=vmem, size = 0x400, scoped, tag = 'output window, operand 2, single buffered']
    %20 = vsyncpa [#allocation5], 0
    %21 = vsyncpa [#allocation7], 0
    // Predicated region
    $region2: #{tpu_custom_call.1} parent=1 // pred_check
      _
    $region3: #{tpu_custom_call.1} parent=1 // pred_check_branch
      %23 = sbr.rel (0) target = $region5
    $region4: #{tpu_custom_call.1} parent=1 // pred_region
      _
    $region5: #{tpu_custom_call.1} parent=1 // pred_fallthru
      _
    // Predicated region
    $region6: #{tpu_custom_call.1} parent=1 // pred_check
      _
    $region7: #{tpu_custom_call.1} parent=1 // pred_check_branch
      %25 = sbr.rel (0) target = $region9
    $region8: #{tpu_custom_call.1} parent=1 // pred_region
      _
    $region9: #{tpu_custom_call.1} parent=1 // pred_fallthru
      _
    // Predicated region
    $region10: #{tpu_custom_call.1} parent=1 // pred_check
      _
    $region11: #{tpu_custom_call.1} parent=1 // pred_check_branch
      %27 = sbr.rel (0) target = $region13
    $region12: #{tpu_custom_call.1} parent=1 // pred_region
      _
    $region13: #{tpu_custom_call.1} parent=1 // pred_fallthru
      _
    // Predicated region
    $region14: #{tpu_custom_call.1} parent=1 // pred_check
      _
    $region15: #{tpu_custom_call.1} parent=1 // pred_check_branch
      %29 = sbr.rel (0) target = $region17
    $region16: #{tpu_custom_call.1} parent=1 // pred_region
      _
    $region17: #{tpu_custom_call.1} parent=1 // pred_fallthru
      _
    // Predicated region
    $region18: #{tpu_custom_call.1} parent=1 // pred_check
      _
    $region19: #{tpu_custom_call.1} parent=1 // pred_check_branch
      %31 = sbr.rel (0) target = $region21
    $region20: #{tpu_custom_call.1} parent=1 // pred_region
      _
    $region21: #{tpu_custom_call.1} parent=1 // pred_fallthru
      _
    // Predicated region
    $region22: #{tpu_custom_call.1} parent=1 // pred_check
      _
    $region23: #{tpu_custom_call.1} parent=1 // pred_check_branch
      %33 = sbr.rel (0) target = $region25
    $region24: #{tpu_custom_call.1} parent=1 // pred_region
      _
    $region25: #{tpu_custom_call.1} parent=1 // pred_fallthru
      _
    // Predicated region
    $region26: #{tpu_custom_call.1} parent=1 // pred_check
      _
    $region27: #{tpu_custom_call.1} parent=1 // pred_check_branch
      %35 = sbr.rel (0) target = $region29
    $region28: #{tpu_custom_call.1} parent=1 // pred_region
      _
    $region29: #{tpu_custom_call.1} parent=1 // pred_fallthru
      _
    // Predicated region
    $region30: #{tpu_custom_call.1} parent=1 // pred_check
      _
    $region31: #{tpu_custom_call.1} parent=1 // pred_check_branch
      %37 = sbr.rel (0) target = $region33
    $region32: #{tpu_custom_call.1} parent=1 // pred_region
      _
    $region33: #{tpu_custom_call.1} parent=1 // pred_fallthru
      _
    // Predicated region
    $region34: #{tpu_custom_call.1} parent=1 // pred_check
      _
    $region35: #{tpu_custom_call.1} parent=1 // pred_check_branch
      %39 = sbr.rel (0) target = $region37
    $region36: #{tpu_custom_call.1} parent=1 // pred_region
      _
    $region37: #{tpu_custom_call.1} parent=1 // pred_fallthru
      _
    // Predicated region
    $region38: #{tpu_custom_call.1} parent=1 // pred_check
      _
    $region39: #{tpu_custom_call.1} parent=1 // pred_check_branch
      %41 = sbr.rel (0) target = $region41
    $region40: #{tpu_custom_call.1} parent=1 // pred_region
      _
    $region41: #{tpu_custom_call.1} parent=1 // pred_fallthru
      _
    // Predicated region
    $region42: #{tpu_custom_call.1} parent=1 // pred_check
      _
    $region43: #{tpu_custom_call.1} parent=1 // pred_check_branch
      %43 = sbr.rel (0) target = $region45
    $region44: #{tpu_custom_call.1} parent=1 // pred_region
      _
    $region45: #{tpu_custom_call.1} parent=1 // pred_fallthru
      _
    // Predicated region
    $region46: #{tpu_custom_call.1} parent=1 // pred_check
      _
    $region47: #{tpu_custom_call.1} parent=1 // pred_check_branch
      %45 = sbr.rel (0) target = $region49
    $region48: #{tpu_custom_call.1} parent=1 // pred_region
      _
    $region49: #{tpu_custom_call.1} parent=1 // pred_fallthru
      _
    %p47 = scmp.eq.s32.totalorder 0, 0
    // Predicated region
    $region50: #{tpu_custom_call.1} parent=1 // pred_check
      %p48 = pneg %p47
    $region51: #{tpu_custom_call.1} parent=1 // pred_check_branch
      %50 = sbr.rel (%p48) target = $region53
    $region52: #{tpu_custom_call.1} parent=1 // pred_region
      %v51 = vld [vmem:[%s1] sm:$0x3]
      %v52 = vpack.c.bf16 %v51, %v51
      %v53 = vld [vmem:[%s4] sm:$0xf]
      %v54 = vld [vmem:[%s4 + $0x4] sm:$0xf]
      %v55 = vld [vmem:[%s4 + $0x8] sm:$0xf]
      %v56 = vld [vmem:[%s4 + $0xc] sm:$0xf]
      %v61 = vunpack.c.l.b16 %v53
      %v62 = vunpack.c.l.b16 %v54
      %v63 = vunpack.c.l.b16 %v55
      %v64 = vunpack.c.l.b16 %v56
      %v65 = vpack.c.b16 %v62, %v61
      %v66 = vpack.c.b16 %v64, %v63
      %vm69 = vcmask 261120
      %v71 = vsel %vm69, %v52, 0
      %73 = vmatprep.subr.bf16.mxu0 0
      %74 = vmatpush1.bf16.msra.mxu0 0
      %75 = vmatprep.subr.bf16.mxu0 0
      %76 = vmatpush1.bf16.msra.mxu0 0
      %77 = vmatprep.subr.bf16.mxu0 0
      %78 = vmatpush1.bf16.msra.mxu0 0
      %79 = vmatprep.subr.bf16.mxu0 0
      %80 = vmatpush1.bf16.msra.mxu0 0
      %81 = vmatprep.subr.bf16.mxu0 0
      %82 = vmatpush1.bf16.msra.mxu0 0
      %83 = vmatprep.subr.bf16.mxu0 0
      %84 = vmatpush1.bf16.msra.mxu0 0
      %85 = vmatprep.subr.bf16.mxu0 0
      %86 = vmatpush1.bf16.msra.mxu0 %v66
      %87 = vmatprep.subr.bf16.mxu0 0
      %88 = vmatpush1.bf16.msra.mxu0 %v65
      %89 = vmatprep.subr.bf16.mxu0 0
      %90 = vmatpush2.bf16.msra.mxu0 0
      %91 = vmatprep.subr.bf16.mxu0 0
      %92 = vmatpush2.bf16.msra.mxu0 0
      %93 = vmatprep.subr.bf16.mxu0 0
      %94 = vmatpush2.bf16.msra.mxu0 0
      %95 = vmatprep.subr.bf16.mxu0 0
      %96 = vmatpush2.bf16.msra.mxu0 0
      %97 = vmatprep.subr.bf16.mxu0 0
      %98 = vmatpush2.bf16.msra.mxu0 0
      %99 = vmatprep.subr.bf16.mxu0 0
      %100 = vmatpush2.bf16.msra.mxu0 0
      %101 = vmatprep.subr.bf16.mxu0 0
      %102 = vmatpush2.bf16.msra.mxu0 0
      %103 = vmatprep.subr.bf16.mxu0 0
      %104 = vmatpush2.bf16.msra.mxu0 0
      %105 = vmatprep.mubr.bf16.mxu0 0
      %106 = vmatmul.mubr.bf16.gmra.mxu0 %v71
      %v107 = vpop.f32.mrf.mxu0
      %v108 = vadd.f32 0.0, %v107
      %v109 = vpop.f32.mrf.mxu0
      %v110 = vpop.f32.mrf.mxu0
      %v111 = vpop.f32.mrf.mxu0
      %112 = vdwg.mxu0
      %v113 = vld [vmem:[%s5] sm:$0x1]
      %v115 = vlaneseq
      %v116 = vshrl.u32 %v115, 7
      %v117 = vsub.s32 0, %v116
      %v118 = vrot.slane %v113, %v117
      %v120 = vadd.f32 %v108, %v118
      %v121 = vld [vmem:[%s9] sm:$0x1]
      %v123 = vlaneseq
      %v124 = vshrl.u32 %v123, 7
      %v125 = vsub.s32 0, %v124
      %v126 = vrot.slane %v121, %v125
      %127 = vrot.lane.b32.xlu0 %v126, 32
      %v128 = vpop.permute.xlu0 %127
      %v130 = vadd.f32 %v108, %v128
      %v131 = vld [vmem:[%s6] sm:$0x1]
      %v132 = vld [vmem:[%s0] sm:$0xf]
      %v133 = vld [vmem:[%s0 + $0x4] sm:$0xf]
      %v134 = vld [vmem:[%s3] sm:$0xf]
      %v135 = vld [vmem:[%s3 + $0x4] sm:$0xf]
      %v136 = vld [vmem:[%s3 + $0x8] sm:$0xf]
      %v137 = vld [vmem:[%s3 + $0xc] sm:$0xf]
      %v138 = vld [vmem:[%s3 + $0x10] sm:$0xf]
      %v139 = vld [vmem:[%s3 + $0x14] sm:$0xf]
      %v140 = vld [vmem:[%s3 + $0x18] sm:$0xf]
      %v141 = vld [vmem:[%s3 + $0x1c] sm:$0xf]
      %v144 = vunpack.c.l.b16 %v132
      %v145 = vunpack.c.l.b16 %v133
      %v146 = vpack.c.b16 %v145, %v144
      %v155 = vunpack.c.l.b16 %v134
      %v156 = vunpack.c.l.b16 %v135
      %v157 = vunpack.c.l.b16 %v136
      %v158 = vunpack.c.l.b16 %v137
      %v159 = vunpack.c.l.b16 %v138
      %v160 = vunpack.c.l.b16 %v139
      %v161 = vunpack.c.l.b16 %v140
      %v162 = vunpack.c.l.b16 %v141
      %v163 = vpack.c.b16 %v156, %v155
      %v164 = vpack.c.b16 %v158, %v157
      %v165 = vpack.c.b16 %v160, %v159
      %v166 = vpack.c.b16 %v162, %v161
      %vm171 = vcmask 523264
      %v173 = vsel %vm171, %v146, 0
      %175 = vmatprep.subr.bf16.mxu0 0
      %176 = vmatpush1.bf16.msra.mxu0 0
      %177 = vmatprep.subr.bf16.mxu0 0
      %178 = vmatpush1.bf16.msra.mxu0 0
      %179 = vmatprep.subr.bf16.mxu0 0
      %180 = vmatpush1.bf16.msra.mxu0 0
      %181 = vmatprep.subr.bf16.mxu0 0
      %182 = vmatpush1.bf16.msra.mxu0 0
      %183 = vmatprep.subr.bf16.mxu0 0
      %184 = vmatpush1.bf16.msra.mxu0 %v166
      %185 = vmatprep.subr.bf16.mxu0 0
      %186 = vmatpush1.bf16.msra.mxu0 %v165
      %187 = vmatprep.subr.bf16.mxu0 0
      %188 = vmatpush1.bf16.msra.mxu0 %v164
      %189 = vmatprep.subr.bf16.mxu0 0
      %190 = vmatpush1.bf16.msra.mxu0 %v163
      %191 = vmatprep.subr.bf16.mxu0 0
      %192 = vmatpush2.bf16.msra.mxu0 0
      %193 = vmatprep.subr.bf16.mxu0 0
      %194 = vmatpush2.bf16.msra.mxu0 0
      %195 = vmatprep.subr.bf16.mxu0 0
      %196 = vmatpush2.bf16.msra.mxu0 0
      %197 = vmatprep.subr.bf16.mxu0 0
      %198 = vmatpush2.bf16.msra.mxu0 0
      %199 = vmatprep.subr.bf16.mxu0 0
      %200 = vmatpush2.bf16.msra.mxu0 0
      %201 = vmatprep.subr.bf16.mxu0 0
      %202 = vmatpush2.bf16.msra.mxu0 0
      %203 = vmatprep.subr.bf16.mxu0 0
      %204 = vmatpush2.bf16.msra.mxu0 0
      %205 = vmatprep.subr.bf16.mxu0 0
      %206 = vmatpush2.bf16.msra.mxu0 0
      %207 = vmatprep.mubr.bf16.mxu0 0
      %208 = vmatmul.mubr.bf16.gmra.mxu0 %v173
      %v209 = vpop.f32.mrf.mxu0
      %v210 = vadd.f32 0.0, %v209
      %v211 = vpop.f32.mrf.mxu0
      %v212 = vpop.f32.mrf.mxu0
      %v213 = vadd.f32 0.0, %v212
      %v214 = vpop.f32.mrf.mxu0
      %215 = vdwg.mxu0
      %v218 = vunpack.c.l.s4 1966171168
      %v219 = vunpack.c.0.s8 %v218
      %v220 = vlaneseq
      %v221 = vshrl.u32 %v220, 7
      %v222 = vsub.s32 %v219, %v221
      %v223 = vrot.slane %v120, %v222
      %v224 = vcombine.high %v223, %v223
      %v226 = vunpack.c.l.s4 1966171168
      %v227 = vunpack.c.0.s8 %v226
      %v228 = vlaneseq
      %v229 = vshrl.u32 %v228, 7
      %v230 = vsub.s32 %v227, %v229
      %v231 = vrot.slane %v223, %v230
      %v233 = vunpack.c.l.s4 1966171168
      %v234 = vunpack.c.0.s8 %v233
      %v235 = vlaneseq
      %v236 = vshrl.u32 %v235, 7
      %v237 = vsub.s32 %v234, %v236
      %v238 = vrot.slane %v224, %v237
      %v239 = vlaneseq
      %v240 = vshrl.u32 %v239, 7
      %v241 = vsub.s32 0, %v240
      %v242 = vrot.slane %v231, %v241
      %v243 = vlaneseq
      %v244 = vshrl.u32 %v243, 7
      %v245 = vsub.s32 0, %v244
      %v246 = vrot.slane %v238, %v245
      %v249 = vadd.f32 %v210, %v242
      %v250 = vadd.f32 %v213, %v246
      %v251 = vtanh.pop %v249
      %v252 = vtanh.pop %v250
      %v254 = vlaneseq
      %v255 = vshrl.u32 %v254, 7
      %v256 = vsub.s32 0, %v255
      %v257 = vrot.slane %v131, %v256
      %v259 = vmul.f32 %v251, %v257
      %v260 = vmul.f32 %v252, %v257
      %v261 = vsel %vm69, %v259, 0.0
      %262 = vadd.xlane.f32.xlu0 %v261
      %v263 = vpop.xlane.xlu0 %262
      %v264 = vsel %vm69, %v260, 0.0
      %265 = vadd.xlane.f32.xlu0 %v264
      %v266 = vpop.xlane.xlu0 %265
      %v269 = vlaneseq
      %v270 = vand.u32 %v269, 127
      %v271 = vlaneseq
      %v272 = vshrl.u32 %v271, 7
      %v273 = vsub.s32 %v270, %v272
      %v274 = vrot.slane %v263, %v273
      %v275 = vlaneseq
      %v276 = vshrl.u32 %v275, 7
      %v277 = vsub.s32 %v270, %v276
      %v278 = vrot.slane %v266, %v277
      %vm279 = vcmask 1041409
      %v280 = vsel %vm279, %v278, %v274
      %vm282 = vcmask 58368
      %283 = vst.msk [vmem:[#allocation3] sm:$0x3] %vm282, %v280
      %v284 = vld [vmem:[#allocation3] sm:$0x3]
      %v285 = vsel %vm282, %v284, -inf
      %286 = vmax.xlane.f32.xlu0 %v285
      %v287 = vpop.xlane.xlu0 %286
      %v288 = vsub.f32 %v284, %v287
      %v289 = vmul.f32 %v288, 1.442695
      %v290 = vpow.pop %v289
      %v291 = vsel %vm282, %v290, 0.0
      %292 = vadd.xlane.f32.xlu0 %v291
      %v293 = vpop.xlane.xlu0 %292
      %v294 = vrcp.pop %v293
      %v295 = vmul.f32 %v290, %v294
      %296 = vst.msk [vmem:[#allocation8] sm:$0x3] %vm282, %v295
      %297 = vst.msk [vmem:[#allocation3] sm:$0x3] %vm282, %v295
      %v298 = vlaneseq
      %v299 = vshrl.u32 %v298, 7
      %v300 = vsub.s32 0, %v299
      %v301 = vrot.slane %v295, %v300
      %303 = vbcast.lane.b32.xlu0 %v301, 256
      %v304 = vpop.permute.xlu0 %303
      %v305 = vlaneseq
      %v306 = vshrl.u32 %v305, 7
      %v307 = vsub.s32 1, %v306
      %v308 = vrot.slane %v295, %v307
      %310 = vbcast.lane.b32.xlu0 %v308, 256
      %v311 = vpop.permute.xlu0 %310
      %v312 = vld [vmem:[%s0] sm:$0xf]
      %v313 = vld [vmem:[%s0 + $0x4] sm:$0xf]
      %v314 = vunpack.c.l.bf16 %v312
      %v315 = vunpack.c.l.bf16 %v313
      %v316 = vmul.f32 %v304, %v314
      %v317 = vmul.f32 %v311, %v315
      %v318 = vsel %vm171, %v316, 0.0
      %v319 = vrot.slane %v318, 4
      %v320 = vadd.f32 %v318, %v319
      %v321 = vrot.slane %v320, 2
      %v322 = vadd.f32 %v320, %v321
      %v323 = vrot.slane %v322, 1
      %v324 = vadd.f32 %v322, %v323
      %v325 = vsel %vm171, %v317, 0.0
      %v326 = vrot.slane %v325, 4
      %v327 = vadd.f32 %v325, %v326
      %v328 = vrot.slane %v327, 2
      %v329 = vadd.f32 %v327, %v328
      %v330 = vrot.slane %v329, 1
      %v331 = vadd.f32 %v329, %v330
      %v332 = vld [vmem:[%s2] sm:$0x1]
      %v333 = vpack.c.bf16 %v324, %v324
      %v334 = vpack.c.bf16 %v331, %v331
      %v337 = vunpack.c.l.b16 %v333
      %v338 = vunpack.c.l.b16 %v334
      %v339 = vsel %vm279, %v338, %v337
      %v340 = vpack.c.b16 %v339, %v339
      %341 = vrot.lane.b32.xlu0 %v340, 16
      %v342 = vpop.permute.xlu0 %341
      %vm343 = vcmask 130048
      %v346 = vsel %vm343, %v332, %v342
      %v347 = vld [vmem:[%s7] sm:$0xf]
      %v348 = vld [vmem:[%s7 + $0x4] sm:$0xf]
      %v349 = vld [vmem:[%s7 + $0x8] sm:$0xf]
      %v350 = vld [vmem:[%s7 + $0xc] sm:$0xf]
      %v351 = vld [vmem:[%s7 + $0x10] sm:$0xf]
      %v352 = vld [vmem:[%s7 + $0x14] sm:$0xf]
      %v353 = vld [vmem:[%s7 + $0x18] sm:$0xf]
      %v354 = vld [vmem:[%s7 + $0x1c] sm:$0xf]
      %v355 = vld [vmem:[%s7 + $0x20] sm:$0xf]
      %v356 = vld [vmem:[%s7 + $0x24] sm:$0xf]
      %v357 = vld [vmem:[%s8] sm:$0x1]
      %v359 = vlaneseq
      %v360 = vshrl.u32 %v359, 7
      %v361 = vsub.s32 0, %v360
      %v362 = vrot.slane %v357, %v361
      %v374 = vunpack.c.l.b16 %v347
      %v375 = vunpack.c.l.b16 %v348
      %v376 = vunpack.c.l.b16 %v349
      %v377 = vunpack.c.l.b16 %v350
      %v378 = vunpack.c.l.b16 %v351
      %v379 = vunpack.c.l.b16 %v352
      %v380 = vunpack.c.l.b16 %v353
      %v381 = vunpack.c.l.b16 %v354
      %v382 = vunpack.c.l.b16 %v355
      %v383 = vunpack.c.l.b16 %v356
      %v384 = vpack.c.b16 %v375, %v374
      %v385 = vpack.c.b16 %v377, %v376
      %v386 = vpack.c.b16 %v379, %v378
      %v387 = vpack.c.b16 %v381, %v380
      %v388 = vpack.c.b16 %v383, %v382
      %vm394 = vcmask 654336
      %v395 = vsel %vm394, %v346, 0
      %397 = vmatprep.subr.bf16.mxu0 0
      %398 = vmatpush1.bf16.msra.mxu0 0
      %399 = vmatprep.subr.bf16.mxu0 0
      %400 = vmatpush1.bf16.msra.mxu0 0
      %401 = vmatprep.subr.bf16.mxu0 0
      %402 = vmatpush1.bf16.msra.mxu0 0
      %403 = vmatprep.subr.bf16.mxu0 0
      %404 = vmatpush1.bf16.msra.mxu0 %v388
      %405 = vmatprep.subr.bf16.mxu0 0
      %406 = vmatpush1.bf16.msra.mxu0 %v387
      %407 = vmatprep.subr.bf16.mxu0 0
      %408 = vmatpush1.bf16.msra.mxu0 %v386
      %409 = vmatprep.subr.bf16.mxu0 0
      %410 = vmatpush1.bf16.msra.mxu0 %v385
      %411 = vmatprep.subr.bf16.mxu0 0
      %412 = vmatpush1.bf16.msra.mxu0 %v384
      %413 = vmatprep.subr.bf16.mxu0 0
      %414 = vmatpush2.bf16.msra.mxu0 0
      %415 = vmatprep.subr.bf16.mxu0 0
      %416 = vmatpush2.bf16.msra.mxu0 0
      %417 = vmatprep.subr.bf16.mxu0 0
      %418 = vmatpush2.bf16.msra.mxu0 0
      %419 = vmatprep.subr.bf16.mxu0 0
      %420 = vmatpush2.bf16.msra.mxu0 0
      %421 = vmatprep.subr.bf16.mxu0 0
      %422 = vmatpush2.bf16.msra.mxu0 0
      %423 = vmatprep.subr.bf16.mxu0 0
      %424 = vmatpush2.bf16.msra.mxu0 0
      %425 = vmatprep.subr.bf16.mxu0 0
      %426 = vmatpush2.bf16.msra.mxu0 0
      %427 = vmatprep.subr.bf16.mxu0 0
      %428 = vmatpush2.bf16.msra.mxu0 0
      %429 = vmatprep.mubr.bf16.mxu0 0
      %430 = vmatmul.mubr.bf16.gmra.mxu0 %v395
      %v431 = vpop.f32.mrf.mxu0
      %v432 = vadd.f32 %v362, %v431
      %v433 = vpop.f32.mrf.mxu0
      %v434 = vpop.f32.mrf.mxu0
      %v435 = vpop.f32.mrf.mxu0
      %436 = vdwg.mxu0
      %438 = vrot.lane.b32.xlu0 %v130, 96
      %v439 = vpop.permute.xlu0 %438
      %v441 = vadd.f32 %v432, %v439
      %v442 = vxor.u32 %v441, 2147483648
      %v443 = vmul.f32 %v442, 1.442695
      %v444 = vpow.pop %v443
      %v445 = vadd.f32 %v444, 1.0
      %v446 = vrcp.pop %v445
      %v447 = vmul.f32 1.0, %v446
      %448 = vrot.lane.b32.xlu0 %v130, 32
      %v449 = vpop.permute.xlu0 %448
      %v451 = vmul.f32 %v447, %v449
      %453 = vrot.lane.b32.xlu0 %v451, 64
      %v454 = vpop.permute.xlu0 %453
      %v456 = vadd.f32 %v432, %v454
      %v457 = vtanh.pop %v456
      %v458 = vsub.f32 1.0, %v447
      %460 = vrot.lane.b32.xlu0 %v457, 96
      %v461 = vpop.permute.xlu0 %460
      %v463 = vmul.f32 %v458, %v461
      %465 = vrot.lane.b32.xlu0 %v51, 32
      %v466 = vpop.permute.xlu0 %465
      %v468 = vmul.f32 %v447, %v466
      %v469 = vadd.f32 %v463, %v468
      %471 = vrot.lane.b32.xlu0 %v469, 96
      %v472 = vpop.permute.xlu0 %471
      %vm474 = vcmask 254976
      %475 = vst.msk [vmem:[#allocation6] sm:$0x3] %vm474, %v472
      %v476 = vpack.c.bf16 %v469, %v469
      %v479 = vunpack.c.l.s4 1966171168
      %v480 = vunpack.c.0.s8 %v479
      %v481 = vlaneseq
      %v482 = vshrl.u32 %v481, 7
      %v483 = vsub.s32 %v480, %v482
      %v484 = vrot.slane %v476, %v483
      %v486 = vunpack.c.l.s4 1966171168
      %v487 = vunpack.c.0.s8 %v486
      %v488 = vlaneseq
      %v489 = vshrl.u32 %v488, 7
      %v490 = vsub.s32 %v487, %v489
      %v491 = vrot.slane %v484, %v490
      %492 = vrot.lane.b32.xlu0 %v491, 96
      %v493 = vpop.permute.xlu0 %492
      %vm495 = vcmask 253952
      %496 = vst.msk [vmem:[#allocation2] sm:$0x1] %vm495, %v493
    $region53: #{tpu_custom_call.1} parent=1 // pred_fallthru
      _
    %v497 = vld [vmem:[#allocation2] sm:$0x1]
    %v498 = vld [vmem:[%s10] sm:$0xf]
    %v499 = vld [vmem:[%s10 + $0x4] sm:$0xf]
    %v500 = vld [vmem:[%s10 + $0x8] sm:$0xf]
    %v501 = vld [vmem:[%s10 + $0xc] sm:$0xf]
    %v502 = vld [vmem:[%s11] sm:$0x1]
    %v504 = vlaneseq
    %v505 = vshrl.u32 %v504, 7
    %v506 = vsub.s32 0, %v505
    %v507 = vrot.slane %v502, %v506
    %v513 = vunpack.c.l.b16 %v498
    %v514 = vunpack.c.l.b16 %v499
    %v515 = vunpack.c.l.b16 %v500
    %v516 = vunpack.c.l.b16 %v501
    %v517 = vpack.c.b16 %v514, %v513
    %v518 = vpack.c.b16 %v516, %v515
    %vm521 = vcmask 261120
    %v523 = vsel %vm521, %v497, 0
    %525 = vmatprep.subr.bf16.mxu0 0
    %526 = vmatpush1.bf16.msra.mxu0 0
    %527 = vmatprep.subr.bf16.mxu0 0
    %528 = vmatpush1.bf16.msra.mxu0 0
    %529 = vmatprep.subr.bf16.mxu0 0
    %530 = vmatpush1.bf16.msra.mxu0 0
    %531 = vmatprep.subr.bf16.mxu0 0
    %532 = vmatpush1.bf16.msra.mxu0 0
    %533 = vmatprep.subr.bf16.mxu0 0
    %534 = vmatpush1.bf16.msra.mxu0 0
    %535 = vmatprep.subr.bf16.mxu0 0
    %536 = vmatpush1.bf16.msra.mxu0 0
    %537 = vmatprep.subr.bf16.mxu0 0
    %538 = vmatpush1.bf16.msra.mxu0 %v518
    %539 = vmatprep.subr.bf16.mxu0 0
    %540 = vmatpush1.bf16.msra.mxu0 %v517
    %541 = vmatprep.subr.bf16.mxu0 0
    %542 = vmatpush2.bf16.msra.mxu0 0
    %543 = vmatprep.subr.bf16.mxu0 0
    %544 = vmatpush2.bf16.msra.mxu0 0
    %545 = vmatprep.subr.bf16.mxu0 0
    %546 = vmatpush2.bf16.msra.mxu0 0
    %547 = vmatprep.subr.bf16.mxu0 0
    %548 = vmatpush2.bf16.msra.mxu0 0
    %549 = vmatprep.subr.bf16.mxu0 0
    %550 = vmatpush2.bf16.msra.mxu0 0
    %551 = vmatprep.subr.bf16.mxu0 0
    %552 = vmatpush2.bf16.msra.mxu0 0
    %553 = vmatprep.subr.bf16.mxu0 0
    %554 = vmatpush2.bf16.msra.mxu0 0
    %555 = vmatprep.subr.bf16.mxu0 0
    %556 = vmatpush2.bf16.msra.mxu0 0
    %557 = vmatprep.mubr.bf16.mxu0 0
    %558 = vmatmul.mubr.bf16.gmra.mxu0 %v523
    %v559 = vpop.f32.mrf.mxu0
    %v560 = vadd.f32 %v507, %v559
    %v561 = vpop.f32.mrf.mxu0
    %v562 = vpop.f32.mrf.mxu0
    %v563 = vpop.f32.mrf.mxu0
    %564 = vdwg.mxu0
    %vm565 = vcmask 123904
    %566 = vst.msk [vmem:[#allocation4] sm:$0x3] %vm565, %v560
    // Predicated region
    $region54: #{tpu_custom_call.1} parent=1 // pred_check
      _
    $region55: #{tpu_custom_call.1} parent=1 // pred_check_branch
      %568 = sbr.rel (0) target = $region57
    $region56: #{tpu_custom_call.1} parent=1 // pred_region
      %s570 = ssub.s32 32, 32
      %571 = vsyncadd [#allocation5], %s570
      %s573 = sshll.u32 [#allocation4], 4
      %s574 = int_to_ptr.vmem [resolvable:$true] %s573
      %576 = dma.vmem_to_hbm [thread:$0]  %s574, 32, %s12, [#allocation5]
    $region57: #{tpu_custom_call.1} parent=1 // pred_fallthru
      _
    // Predicated region
    $region58: #{tpu_custom_call.1} parent=1 // pred_check
      _
    $region59: #{tpu_custom_call.1} parent=1 // pred_check_branch
      %578 = sbr.rel (0) target = $region61
    $region60: #{tpu_custom_call.1} parent=1 // pred_region
      %s580 = ssub.s32 32, 32
      %581 = vsyncadd [#allocation7], %s580
      %s583 = sshll.u32 [#allocation6], 4
      %s584 = int_to_ptr.vmem [resolvable:$true] %s583
      %586 = dma.vmem_to_hbm [thread:$0]  %s584, 32, %s13, [#allocation7]
    $region61: #{tpu_custom_call.1} parent=1 // pred_fallthru
      _
    // Predicated region
    $region62: #{tpu_custom_call.1} parent=1 // pred_check
      _
    $region63: #{tpu_custom_call.1} parent=1 // pred_check_branch
      %588 = sbr.rel (0) target = $region65
    $region64: #{tpu_custom_call.1} parent=1 // pred_region
      %s590 = ssub.s32 32, 32
      %591 = vsyncadd [#allocation7], %s590
      %s593 = sshll.u32 [#allocation8], 4
      %s594 = int_to_ptr.vmem [resolvable:$true] %s593
      %596 = dma.vmem_to_hbm [thread:$0]  %s594, 32, %s14, [#allocation7]
    $region65: #{tpu_custom_call.1} parent=1 // pred_fallthru
      _
    // Predicated region
    $region66: #{tpu_custom_call.1} parent=1 // pred_check
      _
    $region67: #{tpu_custom_call.1} parent=1 // pred_check_branch
      %598 = sbr.rel (0) target = $region69
    $region68: #{tpu_custom_call.1} parent=1 // pred_region
      %599 = dma.done [#allocation5], 32
    $region69: #{tpu_custom_call.1} parent=1 // pred_fallthru
      _
    // Predicated region
    $region70: #{tpu_custom_call.1} parent=1 // pred_check
      _
    $region71: #{tpu_custom_call.1} parent=1 // pred_check_branch
      %601 = sbr.rel (0) target = $region73
    $region72: #{tpu_custom_call.1} parent=1 // pred_region
      %602 = dma.done [#allocation7], 32
    $region73: #{tpu_custom_call.1} parent=1 // pred_fallthru
      _
    // Predicated region
    $region74: #{tpu_custom_call.1} parent=1 // pred_check
      _
    $region75: #{tpu_custom_call.1} parent=1 // pred_check_branch
      %604 = sbr.rel (0) target = $region77
    $region76: #{tpu_custom_call.1} parent=1 // pred_region
      %605 = dma.done [#allocation7], 32
    $region77: #{tpu_custom_call.1} parent=1 // pred_fallthru
      _
    %606 = vsyncpa [#allocation5], 1
    %607 = vsyncpa [#allocation7], 1

</llo_original>
